<compile_context>
chip_gen: v5e
topology: v5e:2x2
jax: 0.10.0
libtpu: 0.0.40
codegen_flags: <defaults>
</compile_context>

<pallas_src>
import functools

import jax
import jax.numpy as jnp
from jax.experimental import pallas as pl
from jax.experimental.pallas import tpu as pltpu

_IN_EPS = 1e-5            # nn.InstanceNorm2d default eps
_L2_EPS = 1e-12           # F.normalize default eps

_VMEM_LIMIT_BYTES = 48 * 1024 * 1024   # explicit scoped-VMEM limit (<= v7x 64 MiB physical)
_RESIDENT_BUDGET = 40 * 1024 * 1024    # max estimated VMEM footprint for the 1-read path
_MAX_TILE_BYTES = 4 * 1024 * 1024      # per-HW-tile f32 budget for the tiled fallback
_PACK_TARGET_BYTES = 512 * 1024        # pack batch elements until a block reaches this


# --------------------------------------------------------------------------- #
# Tiling heuristics
# --------------------------------------------------------------------------- #
def _choose_bn(n, c, hw):
    """Batch elements per block.

    Packs small C*HW images into bigger blocks to amortize the ~0.35us
    per-grid-step overhead (byte target -> implicitly dtype/channel aware),
    but never drops below 2 batch blocks when N >= 2 so the 'parallel' grid
    axis can shard across v7x's two TensorCores.
    """
    per_item = c * hw * 4   # f32 working bytes per batch element
    bn = 1
    for d in range(1, n + 1):
        if n % d:
            continue
        if n >= 2 and n // d < 2:
            break
        bn = d
        if d * per_item >= _PACK_TARGET_BYTES:
            break
    return bn


def _choose_hw_tile(hwp, c, bn, max_tile_bytes):
    """Largest multiple-of-128 divisor of hwp whose (bn,c,tile) f32 slab fits budget."""
    assert hwp % 128 == 0
    max_lanes = max(128, (max_tile_bytes // (bn * c * 4)) // 128 * 128)
    if hwp <= max_lanes:
        return hwp
    tile = 128
    for cand in range(128, min(hwp, max_lanes) + 1, 128):
        if hwp % cand == 0:
            tile = cand
    return tile


# --------------------------------------------------------------------------- #
# Kernels
# --------------------------------------------------------------------------- #
def _resident_kernel(x_ref, w_ref, b_ref, o_ref, *, hw, l2):
    """Single-read path: whole (bn, C, HW) slab is resident in VMEM."""
    x = x_ref[...].astype(jnp.float32)                       # (bn, C, HW)
    inv_n = 1.0 / float(hw)
    mean = jnp.sum(x, axis=2, keepdims=True) * inv_n          # (bn, C, 1)
    centered = x - mean
    sq = centered * centered
    var = jnp.sum(sq, axis=2, keepdims=True) * inv_n          # exact two-pass variance
    inv_std = 1.0 / jnp.sqrt(var + _IN_EPS)                   # (bn, C, 1)
    scale = inv_std * w_ref[...]                              # (C,1) broadcasts over bn
    if l2:
        # ||xn||^2 per pixel with inv_std folded in; xn never materialized.
        ivar = inv_std * inv_std
        ssq = jnp.sum(sq * ivar, axis=1, keepdims=True)       # (bn, 1, HW)
        inv_l2 = jax.lax.rsqrt(jnp.maximum(ssq, _L2_EPS * _L2_EPS))
        y = centered * scale * inv_l2
    else:
        y = centered * scale
    o_ref[...] = (y + b_ref[...]).astype(o_ref.dtype)


def _stats_kernel(x_ref, mean_ref, istd_ref, shift_ref, *, inv_n, pad):
    """Fallback pass 1: per-(n,c) mean / inv_std over lane-aligned HW tiles.

    The tiny (bn,C,1) outputs double as accumulators across the t grid axis,
    so nothing big is pinned during the sweep.
    """
    t = pl.program_id(1)
    x = x_ref[...].astype(jnp.float32)                        # (bn, C, T)

    @pl.when(t == 0)
    def _init():
        # Per-(n,c) shift (first real pixel): shifted sums avoid the
        # E[x^2] - mean^2 cancellation of the plain single-pass variance.
        shift_ref[...] = x[:, :, 0:1]
        mean_ref[...] = jnp.zeros_like(mean_ref)
        istd_ref[...] = jnp.zeros_like(istd_ref)

    xs = x - shift_ref[...]
    mean_ref[...] += jnp.sum(xs, axis=2, keepdims=True)
    istd_ref[...] += jnp.sum(xs * xs, axis=2, keepdims=True)

    @pl.when(t == pl.num_programs(1) - 1)
    def _finalize():
        shift = shift_ref[...]
        s1 = mean_ref[...]
        s2 = istd_ref[...]
        if pad:
            # Remove the `pad` zero-padded pixels' contribution:
            # each adds (0 - shift) to s1 and shift^2 to s2 -- exact correction.
            s1 = s1 + pad * shift
            s2 = s2 - pad * (shift * shift)
        m = s1 * inv_n                        # mean of (x - shift) over real pixels
        var = jnp.maximum(s2 * inv_n - m * m, 0.0)
        mean_ref[...] = shift + m
        istd_ref[...] = 1.0 / jnp.sqrt(var + _IN_EPS)


def _apply_kernel(x_ref, mean_ref, istd_ref, w_ref, b_ref, o_ref, *, l2):
    """Fallback pass 2: re-read tiles, apply inv_std / per-pixel L2 / affine."""
    x = x_ref[...].astype(jnp.float32)                        # (bn, C, T)
    centered = x - mean_ref[...]
    istd = istd_ref[...]                                      # (bn, C, 1), precomputed
    scale = istd * w_ref[...]                                 # tiny (bn,C,1) per tile
    if l2:
        ssq = jnp.sum(centered * centered * (istd * istd), axis=1, keepdims=True)
        inv_l2 = jax.lax.rsqrt(jnp.maximum(ssq, _L2_EPS * _L2_EPS))
        y = centered * scale * inv_l2
    else:
        y = centered * scale
    o_ref[...] = (y + b_ref[...]).astype(o_ref.dtype)


# --------------------------------------------------------------------------- #
# Wrapper
# --------------------------------------------------------------------------- #
def domain_norm(x, weight, bias, l2=True, *,
                resident_budget=_RESIDENT_BUDGET,
                max_tile_bytes=_MAX_TILE_BYTES):
    """DomainNorm forward.  x: (N, C, H, W); weight/bias broadcastable to (1, C, 1, 1)."""
    n, c, h, w = x.shape
    hw = h * w
    itemsize = jnp.dtype(x.dtype).itemsize

    x_flat = x.reshape(n, c, hw)
    w32 = jnp.asarray(weight, dtype=jnp.float32).reshape(c, 1)
    b32 = jnp.asarray(bias, dtype=jnp.float32).reshape(c, 1)

    bn = _choose_bn(n, c, hw)
    nb = n // bn

    block_io = bn * c * hw * itemsize
    block_f32 = bn * c * hw * 4
    # double-buffered in + out blocks, plus ~4 block-sized f32 temporaries in-kernel
    resident_est = 4 * block_io + 4 * block_f32

    if resident_est <= resident_budget:
        # ------------- resident fast path: 1 HBM read + 1 HBM write -------------
        out_flat = pl.pallas_call(
            functools.partial(_resident_kernel, hw=hw, l2=l2),
            out_shape=jax.ShapeDtypeStruct((n, c, hw), x.dtype),
            grid_spec=pltpu.PrefetchScalarGridSpec(
                num_scalar_prefetch=0,
                grid=(nb,),
                in_specs=[
                    pl.BlockSpec((bn, c, hw), lambda i: (i, 0, 0)),
                    pl.BlockSpec((c, 1), lambda i: (0, 0)),
                    pl.BlockSpec((c, 1), lambda i: (0, 0)),
                ],
                out_specs=pl.BlockSpec((bn, c, hw), lambda i: (i, 0, 0)),
            ),
            compiler_params=pltpu.CompilerParams(
                dimension_semantics=("parallel",),
                vmem_limit_bytes=_VMEM_LIMIT_BYTES),
            cost_estimate=pl.CostEstimate(
                flops=int((10 if l2 else 6) * n * c * hw),
                transcendentals=int(n * hw + n * c),
                bytes_accessed=int(2 * n * c * hw * itemsize)),
        )(x_flat, w32, b32)
        return out_flat.reshape(n, c, h, w)

    # ------------------- tiled two-call fallback for large H*W -------------------
    hwp = -(-hw // 128) * 128            # pad HW up to a lane-aligned size
    pad = hwp - hw
    if pad:
        x_flat = jnp.pad(x_flat, ((0, 0), (0, 0), (0, pad)))
    hw_tile = _choose_hw_tile(hwp, c, bn, max_tile_bytes)
    nt = hwp // hw_tile

    # Pass 1: per-(n,c) mean / inv_std.
    # (pipeline_mode=pl.Buffered(3) on the x spec would deepen input buffering;
    #  kept at the default double-buffer for robustness.)
    mean, istd = pl.pallas_call(
        functools.partial(_stats_kernel, inv_n=1.0 / float(hw), pad=pad),
        out_shape=(jax.ShapeDtypeStruct((n, c, 1), jnp.float32),
                   jax.ShapeDtypeStruct((n, c, 1), jnp.float32)),
        grid_spec=pltpu.PrefetchScalarGridSpec(
            num_scalar_prefetch=0,
            grid=(nb, nt),
            in_specs=[pl.BlockSpec((bn, c, hw_tile), lambda i, t: (i, 0, t))],
            out_specs=[pl.BlockSpec((bn, c, 1), lambda i, t: (i, 0, 0)),
                       pl.BlockSpec((bn, c, 1), lambda i, t: (i, 0, 0))],
            scratch_shapes=[pltpu.VMEM((bn, c, 1), jnp.float32)],
        ),
        compiler_params=pltpu.CompilerParams(
            dimension_semantics=("parallel", "arbitrary"),
            vmem_limit_bytes=_VMEM_LIMIT_BYTES),
        cost_estimate=pl.CostEstimate(
            flops=int(3 * n * c * hwp),
            transcendentals=int(n * c),
            bytes_accessed=int(n * c * hwp * itemsize)),
    )(x_flat)

    # Pass 2: re-read the tiles and apply.
    out_p = pl.pallas_call(
        functools.partial(_apply_kernel, l2=l2),
        out_shape=jax.ShapeDtypeStruct((n, c, hwp), x.dtype),
        grid_spec=pltpu.PrefetchScalarGridSpec(
            num_scalar_prefetch=0,
            grid=(nb, nt),
            in_specs=[
                pl.BlockSpec((bn, c, hw_tile), lambda i, t: (i, 0, t)),
                pl.BlockSpec((bn, c, 1), lambda i, t: (i, 0, 0)),
                pl.BlockSpec((bn, c, 1), lambda i, t: (i, 0, 0)),
                pl.BlockSpec((c, 1), lambda i, t: (0, 0)),
                pl.BlockSpec((c, 1), lambda i, t: (0, 0)),
            ],
            out_specs=pl.BlockSpec((bn, c, hw_tile), lambda i, t: (i, 0, t)),
        ),
        compiler_params=pltpu.CompilerParams(
            dimension_semantics=("parallel", "parallel"),
            vmem_limit_bytes=_VMEM_LIMIT_BYTES),
        cost_estimate=pl.CostEstimate(
            flops=int((9 if l2 else 5) * n * c * hwp),
            transcendentals=int(n * hwp),
            bytes_accessed=int(2 * n * c * hwp * itemsize)),
    )(x_flat, mean, istd, w32, b32)

    if pad:
        out_p = out_p[:, :, :hw]
    return out_p.reshape(n, c, h, w)


# --------------------------------------------------------------------------- #
# Pure-JAX reference (mirror of the PyTorch forward) + tests
# --------------------------------------------------------------------------- #
def _reference(x, weight, bias, l2=True):
    xf = x.astype(jnp.float32)
    mean = jnp.mean(xf, axis=(2, 3), keepdims=True)
    var = jnp.mean((xf - mean) ** 2, axis=(2, 3), keepdims=True)
    xn = (xf - mean) / jnp.sqrt(var + _IN_EPS)
    if l2:
        nrm = jnp.sqrt(jnp.sum(xn * xn, axis=1, keepdims=True))
        xn = xn / jnp.maximum(nrm, _L2_EPS)
    wv = jnp.asarray(weight, dtype=jnp.float32).reshape(1, -1, 1, 1)
    bv = jnp.asarray(bias, dtype=jnp.float32).reshape(1, -1, 1, 1)
    return (xn * wv + bv).astype(x.dtype)


if __name__ == "__main__":
    key = jax.random.PRNGKey(0)
    kx, kw, kb, k2 = jax.random.split(key, 4)

    # Module-default small shapes: batch=2, channels=4, 16x16 spatial.
    N, C, H, W = 2, 4, 16, 16
    x = jax.random.normal(kx, (N, C, H, W), dtype=jnp.float32) * 2.0 + 0.5
    weight = 1.0 + 0.1 * jax.random.normal(kw, (1, C, 1, 1), dtype=jnp.float32)
    bias = 0.1 * jax.random.normal(kb, (1, C, 1, 1), dtype=jnp.float32)

    # Resident (single-read) fast path, l2 on and off.
    out = jax.block_until_ready(domain_norm(x, weight, bias, l2=True))
    ref = _reference(x, weight, bias, l2=True)
    assert out.shape == (N, C, H, W)
    assert jnp.allclose(out, ref, atol=1e-4, rtol=1e-4), "l2=True mismatch vs reference"

    out0 = jax.block_until_ready(domain_norm(x, weight, bias, l2=False))
    ref0 = _reference(x, weight, bias, l2=False)
    assert jnp.allclose(out0, ref0, atol=1e-4, rtol=1e-4), "l2=False mismatch vs reference"

    # Tiled two-call fallback: force it with a zero resident budget; HW=480 is
    # not a multiple of 128, so this also exercises the zero-pad + shifted-sum
    # correction and multi-tile accumulation.
    x2 = jax.random.normal(k2, (2, 4, 24, 20), dtype=jnp.float32) + 3.0
    out2 = jax.block_until_ready(
        domain_norm(x2, weight, bias, l2=True, resident_budget=0, max_tile_bytes=4096))
    ref2 = _reference(x2, weight, bias, l2=True)
    assert out2.shape == x2.shape
    assert jnp.allclose(out2, ref2, atol=1e-4, rtol=1e-4), "tiled fallback mismatch vs reference"

    print("KERNEL_OK")
</pallas_src>

<mosaic_0001>
module attributes {stable_mosaic.version = 11 : i64} {
  func.func @_resident_kernel(%arg0: i32, %arg1: memref<1x4x256xf32, #tpu.memory_space<vmem>>, %arg2: memref<4x1xf32, #tpu.memory_space<vmem>>, %arg3: memref<4x1xf32, #tpu.memory_space<vmem>>, %arg4: memref<1x4x256xf32, #tpu.memory_space<vmem>>) attributes {dimension_semantics = [#tpu.dimension_semantics<parallel>], iteration_bounds = array<i64: 2>, scalar_prefetch = 0 : i64, scratch_operands = 0 : i64, tpu.core_type = #tpu.core_type<tc>, window_params = [{transform_indices = @transform_0, window_bounds = array<i64: 1, 4, 256>}, {pipeline_mode = #tpu.pipeline_mode<synchronous>, transform_indices = @transform_1, window_bounds = array<i64: 4, 1>}, {pipeline_mode = #tpu.pipeline_mode<synchronous>, transform_indices = @transform_2, window_bounds = array<i64: 4, 1>}, {transform_indices = @transform_3, window_bounds = array<i64: 1, 4, 256>}]} {
    %c0 = arith.constant 0 : index
    %c0_0 = arith.constant 0 : index
    %c0_1 = arith.constant 0 : index
    %0 = vector.load %arg1[%c0, %c0_0, %c0_1] : memref<1x4x256xf32, #tpu.memory_space<vmem>>, vector<1x4x256xf32>
    %cst = arith.constant dense<0.000000e+00> : vector<1x4xf32>
    %1 = vector.multi_reduction <add>, %0, %cst [2] : vector<1x4x256xf32> to vector<1x4xf32>
    %2 = vector.shape_cast %1 : vector<1x4xf32> to vector<1x4x1xf32>
    %cst_2 = arith.constant 3.906250e-03 : f32
    %3 = vector.broadcast %cst_2 : f32 to vector<1x4x1xf32>
    %4 = arith.mulf %2, %3 : vector<1x4x1xf32>
    %5 = vector.broadcast %4 : vector<1x4x1xf32> to vector<1x4x256xf32>
    %6 = arith.subf %0, %5 : vector<1x4x256xf32>
    %7 = arith.mulf %6, %6 : vector<1x4x256xf32>
    %cst_3 = arith.constant dense<0.000000e+00> : vector<1x4xf32>
    %8 = vector.multi_reduction <add>, %7, %cst_3 [2] : vector<1x4x256xf32> to vector<1x4xf32>
    %9 = vector.shape_cast %8 : vector<1x4xf32> to vector<1x4x1xf32>
    %cst_4 = arith.constant 3.906250e-03 : f32
    %10 = vector.broadcast %cst_4 : f32 to vector<1x4x1xf32>
    %11 = arith.mulf %9, %10 : vector<1x4x1xf32>
    %cst_5 = arith.constant 9.99999974E-6 : f32
    %12 = vector.broadcast %cst_5 : f32 to vector<1x4x1xf32>
    %13 = arith.addf %11, %12 : vector<1x4x1xf32>
    %14 = math.sqrt %13 : vector<1x4x1xf32>
    %cst_6 = arith.constant 1.000000e+00 : f32
    %15 = vector.broadcast %cst_6 : f32 to vector<1x4x1xf32>
    %16 = arith.divf %15, %14 : vector<1x4x1xf32>
    %c0_7 = arith.constant 0 : index
    %c0_8 = arith.constant 0 : index
    %17 = vector.load %arg2[%c0_7, %c0_8] : memref<4x1xf32, #tpu.memory_space<vmem>>, vector<4x1xf32>
    %18 = vector.shape_cast %17 : vector<4x1xf32> to vector<1x4x1xf32>
    %19 = arith.mulf %16, %18 : vector<1x4x1xf32>
    %20 = arith.mulf %16, %16 : vector<1x4x1xf32>
    %21 = vector.broadcast %20 : vector<1x4x1xf32> to vector<1x4x256xf32>
    %22 = arith.mulf %7, %21 : vector<1x4x256xf32>
    %cst_9 = arith.constant dense<0.000000e+00> : vector<1x256xf32>
    %23 = vector.multi_reduction <add>, %22, %cst_9 [1] : vector<1x4x256xf32> to vector<1x256xf32>
    %24 = vector.shape_cast %23 : vector<1x256xf32> to vector<1x1x256xf32>
    %cst_10 = arith.constant 1.000000e-24 : f32
    %25 = vector.broadcast %cst_10 : f32 to vector<1x1x256xf32>
    %26 = arith.maximumf %24, %25 : vector<1x1x256xf32>
    %27 = math.rsqrt %26 : vector<1x1x256xf32>
    %28 = vector.broadcast %19 : vector<1x4x1xf32> to vector<1x4x256xf32>
    %29 = arith.mulf %6, %28 : vector<1x4x256xf32>
    %30 = vector.broadcast %27 : vector<1x1x256xf32> to vector<1x4x256xf32>
    %31 = arith.mulf %29, %30 : vector<1x4x256xf32>
    %c0_11 = arith.constant 0 : index
    %c0_12 = arith.constant 0 : index
    %32 = vector.load %arg3[%c0_11, %c0_12] : memref<4x1xf32, #tpu.memory_space<vmem>>, vector<4x1xf32>
    %33 = vector.shape_cast %32 : vector<4x1xf32> to vector<1x4x1xf32>
    %34 = vector.broadcast %33 : vector<1x4x1xf32> to vector<1x4x256xf32>
    %35 = arith.addf %31, %34 : vector<1x4x256xf32>
    %c0_13 = arith.constant 0 : index
    %c0_14 = arith.constant 0 : index
    %c0_15 = arith.constant 0 : index
    %36 = vector.load %arg4[%c0_13, %c0_14, %c0_15] : memref<1x4x256xf32, #tpu.memory_space<vmem>>, vector<1x4x256xf32>
    tpu.vector_store %arg4[%c0_13, %c0_14, %c0_15], %35 {strides = array<i32>} : memref<1x4x256xf32, #tpu.memory_space<vmem>>, vector<1x4x256xf32>,
    return
  }
  func.func @transform_0(%arg0: i32) -> (i32, i32, i32) {
    %c0_i32 = arith.constant 0 : i32
    %c0_i32_0 = arith.constant 0 : i32
    %c0_i32_1 = arith.constant 0 : i32
    return %arg0, %c0_i32, %c0_i32_0 : i32, i32, i32
  }
  func.func @transform_1(%arg0: i32) -> (i32, i32) {
    %c0_i32 = arith.constant 0 : i32
    %c0_i32_0 = arith.constant 0 : i32
    %c0_i32_1 = arith.constant 0 : i32
    return %c0_i32, %c0_i32_0 : i32, i32
  }
  func.func @transform_2(%arg0: i32) -> (i32, i32) {
    %c0_i32 = arith.constant 0 : i32
    %c0_i32_0 = arith.constant 0 : i32
    %c0_i32_1 = arith.constant 0 : i32
    return %c0_i32, %c0_i32_0 : i32, i32
  }
  func.func @transform_3(%arg0: i32) -> (i32, i32, i32) {
    %c0_i32 = arith.constant 0 : i32
    %c0_i32_0 = arith.constant 0 : i32
    %c0_i32_1 = arith.constant 0 : i32
    return %arg0, %c0_i32, %c0_i32_0 : i32, i32, i32
  }
}

</mosaic_0001>

<llo_original>
// kernel: tpu_custom_call.1
$region0: #{tpu_custom_call.1}
  #allocation0 [shape = 'u32[]', space=smem, size = 0x4, offset = 0x4, fixed_abs, tag = 'smem constant byte address 0x4 - core index']
  #allocation1 [shape = 'u32[72,128]{1,0:T(1,128)}', space=vmem, size = 0x9000, scoped, tag = 'internal scratch']
  %s0 = inlined_call_operand.hbm [shape: f32[2,4,256], index: 0, kind: input, shape index: {}]
  %s1 = inlined_call_operand.vmem [shape: f32[4,1], index: 1, kind: input, shape index: {}]
  %s2 = inlined_call_operand.vmem [shape: f32[4,1], index: 2, kind: input, shape index: {}]
  %s3 = inlined_call_operand.hbm [shape: f32[2,4,256], index: 3, kind: output, shape index: {}]
  %s4 = sld [smem:[#allocation0]]
  $region49: #{tpu_custom_call.1} parent=0
    _
  %s6 = ssub.s32 1, %s4
  %s7 = scalar_select 0, %s6, %s4
  $region1: #{tpu_custom_call.1} parent=0
    #allocation2 [shape = 'u8[8192]{0}', space=vmem, size = 0x2000, scoped, tag = 'input window, operand 0']
    #allocation3 [shape = 's32[2]{0}', space=sflag, size = 0x8, scoped, tag = 'scoped memory for tpu_custom_call.1']
    #allocation4 [shape = 's32[2]{0}', space=sflag, size = 0x8, scoped, tag = 'scoped memory for tpu_custom_call.1']
    #allocation5 [shape = 'u8[8192]{0}', space=vmem, size = 0x2000, scoped, tag = 'output window, operand 0']
    %8 = vsyncpa [#allocation3], 0
    %s9 = scalar_lea.sflag [#allocation3], 1
    %10 = vsyncpa %s9, 0
    %11 = vsyncpa [#allocation4], 0
    %s12 = scalar_lea.sflag [#allocation4], 1
    %13 = vsyncpa %s12, 0
    loop: start=0, step=1, limit=4
    $region2: #{tpu_custom_call.1} parent=1 // loop_pre_header
      _
    $region3: #{tpu_custom_call.1} parent=1 // loop_header
      %s15 = sphi 0, %s19
      %p16 = scmp.ge.s32.totalorder %s15, 4
      %s25 = sphi 0, %s27
      %s28 = sphi 0, %s25
      %s29 = sphi 0, %s28
      %s45 = sphi 0, %s29
      %s49 = sphi 0, %s49
      %s51 = sphi 0, %s49
      %s52 = sphi 0, %s51
      %s66 = sphi 0, %s52
      %s70 = sphi 0, %s70
      %s72 = sphi 0, %s70
      %s73 = sphi 0, %s72
      %s87 = sphi 0, %s73
      %s93 = sphi 0, %s95
      %s96 = sphi 0, %s93
      %s97 = sphi 0, %s96
      %s113 = sphi 0, %s97
    $region4: #{tpu_custom_call.1} parent=1 // loop_header_branch
      %18 = sbr.rel (%p16) target = $region8
    $region5: #{tpu_custom_call.1} parent=1 // loop_body
      %s20 = ssub.s32 %s15, 1
      %s21 = ssub.s32 %s15, 2
      %s22 = sadd.s32 %s15, 1
      %s23 = ssub.s32 %s15, %s22
      %p24 = scmp.eq.s32.totalorder %s23, 0
      %s26 = sadd.s32 %s25, 1
      %s27 = scalar_select %p24, %s25, %s26
      %p30 = pneg %p24
      %p31 = scmp.eq.s32.totalorder %s15, 1
      %p32 = por %p30, %p31
      %p33 = scmp.ne.s32.totalorder %s25, %s28
      %p34 = scmp.eq.s32.totalorder %s15, 0
      %p35 = por %p33, %p34
      %p36 = scmp.ne.s32.totalorder %s25, %s28
      %p37 = scmp.eq.s32.totalorder %s20, 1
      %p38 = por %p36, %p37
      %p39 = scmp.ne.s32.totalorder %s28, %s29
      %p40 = scmp.eq.s32.totalorder %s20, 0
      %p41 = por %p39, %p40
      %p42 = scmp.ne.s32.totalorder %s28, %s29
      %p43 = scmp.eq.s32.totalorder %s21, 1
      %p44 = por %p42, %p43
      %p46 = scmp.ne.s32.totalorder %s29, %s45
      %p47 = scmp.eq.s32.totalorder %s21, 0
      %p48 = por %p46, %p47
      %s50 = sadd.s32 %s49, 1
      %p53 = scmp.eq.s32.totalorder %s15, 1
      %p54 = scmp.ne.s32.totalorder %s49, %s51
      %p55 = scmp.eq.s32.totalorder %s15, 0
      %p56 = por %p54, %p55
      %p57 = scmp.ne.s32.totalorder %s49, %s51
      %p58 = scmp.eq.s32.totalorder %s20, 1
      %p59 = por %p57, %p58
      %p60 = scmp.ne.s32.totalorder %s51, %s52
      %p61 = scmp.eq.s32.totalorder %s20, 0
      %p62 = por %p60, %p61
      %p63 = scmp.ne.s32.totalorder %s51, %s52
      %p64 = scmp.eq.s32.totalorder %s21, 1
      %p65 = por %p63, %p64
      %p67 = scmp.ne.s32.totalorder %s52, %s66
      %p68 = scmp.eq.s32.totalorder %s21, 0
      %p69 = por %p67, %p68
      %s71 = sadd.s32 %s70, 1
      %p74 = scmp.eq.s32.totalorder %s15, 1
      %p75 = scmp.ne.s32.totalorder %s70, %s72
      %p76 = scmp.eq.s32.totalorder %s15, 0
      %p77 = por %p75, %p76
      %p78 = scmp.ne.s32.totalorder %s70, %s72
      %p79 = scmp.eq.s32.totalorder %s20, 1
      %p80 = por %p78, %p79
      %p81 = scmp.ne.s32.totalorder %s72, %s73
      %p82 = scmp.eq.s32.totalorder %s20, 0
      %p83 = por %p81, %p82
      %p84 = scmp.ne.s32.totalorder %s72, %s73
      %p85 = scmp.eq.s32.totalorder %s21, 1
      %p86 = por %p84, %p85
      %p88 = scmp.ne.s32.totalorder %s73, %s87
      %p89 = scmp.eq.s32.totalorder %s21, 0
      %p90 = por %p88, %p89
      %s91 = ssub.s32 %s15, %s22
      %p92 = scmp.eq.s32.totalorder %s91, 0
      %s94 = sadd.s32 %s93, 1
      %s95 = scalar_select %p92, %s93, %s94
      %p98 = pneg %p92
      %p99 = scmp.eq.s32.totalorder %s15, 1
      %p100 = por %p98, %p99
      %p101 = scmp.ne.s32.totalorder %s93, %s96
      %p102 = scmp.eq.s32.totalorder %s15, 0
      %p103 = por %p101, %p102
      %p104 = scmp.ne.s32.totalorder %s93, %s96
      %p105 = scmp.eq.s32.totalorder %s20, 1
      %p106 = por %p104, %p105
      %p107 = scmp.ne.s32.totalorder %s96, %s97
      %p108 = scmp.eq.s32.totalorder %s20, 0
      %p109 = por %p107, %p108
      %p110 = scmp.ne.s32.totalorder %s96, %s97
      %p111 = scmp.eq.s32.totalorder %s21, 1
      %p112 = por %p110, %p111
      %p114 = scmp.ne.s32.totalorder %s97, %s113
      %p115 = scmp.eq.s32.totalorder %s21, 0
      %p116 = por %p114, %p115
      %p117 = scmp.le.s32.totalorder 1, %s15
      %p118 = scmp.lt.s32.totalorder %s15, 3
      %p119 = pnand %p117, %p118
      %p120 = pneg %p119
      // Predicated region
      $region9: #{tpu_custom_call.1} parent=5 // pred_check
        _
      $region10: #{tpu_custom_call.1} parent=5 // pred_check_branch
        %122 = sbr.rel (%p119) target = $region12
      $region11: #{tpu_custom_call.1} parent=5 // pred_region
        %s123 = ssub.s32 %s15, 1
        // Predicated region
        $region13: #{tpu_custom_call.1} parent=11 // pred_check
          %p124 = pneg %p62
        $region14: #{tpu_custom_call.1} parent=11 // pred_check_branch
          %126 = sbr.rel (%p124) target = $region16
        $region15: #{tpu_custom_call.1} parent=11 // pred_region
          _
        $region16: #{tpu_custom_call.1} parent=11 // pred_fallthru
          _
        // Predicated region
        $region17: #{tpu_custom_call.1} parent=11 // pred_check
          %p127 = pneg %p83
        $region18: #{tpu_custom_call.1} parent=11 // pred_check_branch
          %129 = sbr.rel (%p127) target = $region20
        $region19: #{tpu_custom_call.1} parent=11 // pred_region
          _
        $region20: #{tpu_custom_call.1} parent=11 // pred_fallthru
          _
      $region12: #{tpu_custom_call.1} parent=5 // pred_fallthru
        _
      %p130 = scmp.lt.s32.totalorder %s15, 2
      // Predicated region
      $region21: #{tpu_custom_call.1} parent=5 // pred_check
        %p131 = pneg %p130
      $region22: #{tpu_custom_call.1} parent=5 // pred_check_branch
        %133 = sbr.rel (%p131) target = $region24
      $region23: #{tpu_custom_call.1} parent=5 // pred_region
        // Predicated region
        $region25: #{tpu_custom_call.1} parent=23 // pred_check
          %p134 = pneg %p35
        $region26: #{tpu_custom_call.1} parent=23 // pred_check_branch
          %136 = sbr.rel (%p134) target = $region28
        $region27: #{tpu_custom_call.1} parent=23 // pred_region
          %s137 = sand.u32 %s25, 1
          %s138 = scalar_lea.sflag [#allocation3], %s137
          %s139 = sand.u32 %s25, 1
          %s140 = smul.addr %s139, 8
          %s141 = scalar_lea.vmem [#allocation2], %s140
          %143 = vsyncadd %s138, 0
          %s144 = smul.addr %s15, 2
          %s145 = smul.addr %s144, 4
          %s146 = scalar_lea.hbm %s0, %s145
          %s148 = sshll.u32 %s146, 4
          %s149 = int_to_ptr.hbm [resolvable:$true] %s148
          %s150 = sshll.u32 %s141, 4
          %s151 = int_to_ptr.vmem [resolvable:$true] %s150
          %153 = dma.hbm_to_vmem [thread:$0]  %s149, 128, %s151, %s138
        $region28: #{tpu_custom_call.1} parent=23 // pred_fallthru
          _
      $region24: #{tpu_custom_call.1} parent=5 // pred_fallthru
        _
      %p154 = scmp.le.s32.totalorder 1, %s15
      %p155 = scmp.lt.s32.totalorder %s15, 3
      %p156 = pnand %p154, %p155
      %p157 = pneg %p156
      // Predicated region
      $region29: #{tpu_custom_call.1} parent=5 // pred_check
        _
      $region30: #{tpu_custom_call.1} parent=5 // pred_check_branch
        %159 = sbr.rel (%p156) target = $region32
      $region31: #{tpu_custom_call.1} parent=5 // pred_region
        %s160 = ssub.s32 %s15, 1
        %s161 = sand.u32 %s28, 1
        %s162 = scalar_lea.sflag [#allocation3], %s161
        %s163 = sand.u32 %s28, 1
        %s164 = smul.addr %s163, 8
        %s165 = scalar_lea.vmem [#allocation2], %s164
        // Predicated region
        $region33: #{tpu_custom_call.1} parent=31 // pred_check
          %p166 = pneg %p41
        $region34: #{tpu_custom_call.1} parent=31 // pred_check_branch
          %168 = sbr.rel (%p166) target = $region36
        $region35: #{tpu_custom_call.1} parent=31 // pred_region
          %170 = dma.done %s162, 128
        $region36: #{tpu_custom_call.1} parent=31 // pred_fallthru
          _
        %s171 = sand.u32 %s28, 1
        %s172 = scalar_lea.sflag [#allocation3], %s171
        %s173 = sand.u32 %s28, 1
        %s174 = smul.addr %s173, 8
        %s175 = scalar_lea.vmem [#allocation2], %s174
        %p176 = pneg %p41
        %p177 = pneg %p38
        %p178 = pneg %p62
        %p179 = pneg %p59
        %p180 = pneg %p83
        %p181 = pneg %p80
        %p182 = pneg %p109
        %p183 = pneg %p106
        %s184 = sand.u32 %s96, 1
        %s185 = scalar_lea.sflag [#allocation4], %s184
        %s186 = sand.u32 %s96, 1
        %s187 = smul.addr %s186, 8
        %s188 = scalar_lea.vmem [#allocation5], %s187
        %v189 = vld [vmem:[%s165] sm:$0xff]
        %191 = vst [vmem:[#allocation1] ss:$2 sm:$0xff] %v189
        %v192 = vld.sshfl [vmem:[#allocation1] sm:$0xff pattern:$0x75316420]
        %v193 = vld.sshfl [vmem:[#allocation1 + $0x8] sm:$0xff pattern:$0x75316420]
        %vm196 = vcmask 1043456
        %v197 = vsel %vm196, %v192, 0.0
        %v198 = vsel %vm196, %v193, 0.0
        %v199 = vadd.f32 %v197, %v198
        %200 = vadd.xlane.f32.xlu0 %v199
        %v201 = vpop.xlane.xlu0 %200
        %v202 = vmul.f32 %v201, 0.00390625
        %v205 = vunpack.c.l.s4 839922192
        %v206 = vunpack.c.0.s8 %v205
        %v207 = vperm.slane %v202, %v206
        %v209 = vsub.f32 %v189, %v207
        %v210 = vmul.f32 %v209, %v209
        %212 = vst [vmem:[#allocation1] ss:$2 sm:$0xff] %v210
        %v213 = vld.sshfl [vmem:[#allocation1] sm:$0xff pattern:$0x75316420]
        %v214 = vld.sshfl [vmem:[#allocation1 + $0x8] sm:$0xff pattern:$0x75316420]
        %v217 = vsel %vm196, %v213, 0.0
        %v218 = vsel %vm196, %v214, 0.0
        %v219 = vadd.f32 %v217, %v218
        %220 = vadd.xlane.f32.xlu0 %v219
        %v221 = vpop.xlane.xlu0 %220
        %v222 = vmul.f32 %v221, 0.00390625
        %v223 = vadd.f32 %v222, 1e-05
        %v224 = vrsqrt.pop %v223
        %v225 = vmul.f32 %v224, %v223
        %v226 = vmul.f32 %v225, %v224
        %v227 = vmul.f32 0.5, %v226
        %v228 = vsub.f32 1.5, %v227
        %v229 = vmul.f32 %v224, %v228
        %v230 = vmul.f32 %v223, %v229
        %vm231 = vcmp.eq.f32.partialorder %v223, inf
        %v232 = vsel %vm231, %v223, %v230
        %vm233 = vcmp.eq.f32.partialorder %v223, 0.0
        %v234 = vand.u32 %v223, 2147483648
        %v235 = vsel %vm233, %v234, %v232
        %v236 = vrcp.pop %v235
        %v237 = vmul.f32 %v235, %v236
        %v238 = vsub.f32 1.0, %v237
        %v239 = vmul.f32 %v236, %v238
        %v240 = vadd.f32 %v236, %v239
        %vm241 = vweird.f32 %v235
        %vm242 = vweird.f32 %v236
        %vm243 = vmor %vm241, %vm242
        %v244 = vsel %vm243, %v236, %v240
        %v245 = vand.u32 2147483647, %v235
        %vm246 = vcmp.eq.f32.partialorder %v245, 8.507059e+37
        %v247 = vand.u32 %v235, 2147483648
        %v248 = vor.u32 1.1754944e-38, %v247
        %v249 = vsel %vm246, %v248, %v244
        %v250 = vmul.f32 1.0, %v249
        %v251 = vld [vmem:[%s1] sm:$0xf]
        %v252 = vmul.f32 %v250, %v251
        %v253 = vmul.f32 %v250, %v250
        %v256 = vunpack.c.l.s4 839922192
        %v257 = vunpack.c.0.s8 %v256
        %v258 = vperm.slane %v253, %v257
        %v260 = vmul.f32 %v210, %v258
        %262 = vst [vmem:[#allocation1] ss:$2 sm:$0xff] %v260
        %v263 = vld.sshfl [vmem:[#allocation1] sm:$0xff pattern:$0x75316420]
        %v264 = vld.sshfl [vmem:[#allocation1 + $0x8] sm:$0xff pattern:$0x75316420]
        %v267 = vsel %vm196, %v263, 0.0
        %v268 = vrot.slane %v267, 4
        %v269 = vadd.f32 %v267, %v268
        %v270 = vrot.slane %v269, 2
        %v271 = vadd.f32 %v269, %v270
        %v272 = vrot.slane %v271, 1
        %v273 = vadd.f32 %v271, %v272
        %v274 = vsel %vm196, %v264, 0.0
        %v275 = vrot.slane %v274, 4
        %v276 = vadd.f32 %v274, %v275
        %v277 = vrot.slane %v276, 2
        %v278 = vadd.f32 %v276, %v277
        %v279 = vrot.slane %v278, 1
        %v280 = vadd.f32 %v278, %v279
        %v281 = vmax.f32 %v273, 1e-24
        %v282 = vmax.f32 %v280, 1e-24
        %v283 = vrsqrt.pop %v281
        %v284 = vmul.f32 %v283, %v281
        %v285 = vmul.f32 %v284, %v283
        %v286 = vmul.f32 0.5, %v285
        %v287 = vsub.f32 1.5, %v286
        %v288 = vmul.f32 %v283, %v287
        %vm289 = vweird.f32 %v281
        %vm290 = vweird.f32 %v283
        %vm291 = vmor %vm289, %vm290
        %v292 = vsel %vm291, %v283, %v288
        %v293 = vrsqrt.pop %v282
        %v294 = vmul.f32 %v293, %v282
        %v295 = vmul.f32 %v294, %v293
        %v296 = vmul.f32 0.5, %v295
        %v297 = vsub.f32 1.5, %v296
        %v298 = vmul.f32 %v293, %v297
        %vm299 = vweird.f32 %v282
        %vm300 = vweird.f32 %v293
        %vm301 = vmor %vm299, %vm300
        %v302 = vsel %vm301, %v293, %v298
        %304 = vset.pattern.permute.xlu0 0
        %305 = vperm.xlu0 %304, %v252
        %v306 = vpop.permute.xlu0 %305
        %v308 = vunpack.c.l.s4 839922192
        %v309 = vunpack.c.0.s8 %v308
        %v310 = vperm.slane %v306, %v309
        %v312 = vmul.f32 %v209, %v310
        %v315 = vrot.slane %v302, 4
        %v316 = vsel %vm196, %v292, %v315
        %v318 = vmul.f32 %v312, %v316
        %v319 = vld [vmem:[%s2] sm:$0xf]
        %321 = vset.pattern.permute.xlu0 0
        %322 = vperm.xlu0 %321, %v319
        %v323 = vpop.permute.xlu0 %322
        %v325 = vunpack.c.l.s4 839922192
        %v326 = vunpack.c.0.s8 %v325
        %v327 = vperm.slane %v323, %v326
        %v329 = vadd.f32 %v318, %v327
        %330 = vst [vmem:[%s188] sm:$0xff] %v329
        %s331 = sand.u32 %s96, 1
        %s332 = scalar_lea.sflag [#allocation4], %s331
        %s333 = sand.u32 %s96, 1
        %s334 = smul.addr %s333, 8
        %s335 = scalar_lea.vmem [#allocation5], %s334
        // Predicated region
        $region37: #{tpu_custom_call.1} parent=31 // pred_check
          %p336 = pneg %p106
        $region38: #{tpu_custom_call.1} parent=31 // pred_check_branch
          %338 = sbr.rel (%p336) target = $region40
        $region39: #{tpu_custom_call.1} parent=31 // pred_region
          %340 = vsyncadd %s332, 0
          %s341 = smul.addr %s20, 2
          %s342 = smul.addr %s341, 4
          %s343 = scalar_lea.hbm %s3, %s342
          %s345 = sshll.u32 %s335, 4
          %s346 = int_to_ptr.vmem [resolvable:$true] %s345
          %s347 = sshll.u32 %s343, 4
          %s348 = int_to_ptr.hbm [resolvable:$true] %s347
          %350 = dma.vmem_to_hbm [thread:$0]  %s346, 128, %s348, %s332
        $region40: #{tpu_custom_call.1} parent=31 // pred_fallthru
          _
      $region32: #{tpu_custom_call.1} parent=5 // pred_fallthru
        _
      %p351 = scmp.le.s32.totalorder 2, %s15
      // Predicated region
      $region41: #{tpu_custom_call.1} parent=5 // pred_check
        %p352 = pneg %p351
      $region42: #{tpu_custom_call.1} parent=5 // pred_check_branch
        %354 = sbr.rel (%p352) target = $region44
      $region43: #{tpu_custom_call.1} parent=5 // pred_region
        %s355 = ssub.s32 %s15, 2
        // Predicated region
        $region45: #{tpu_custom_call.1} parent=43 // pred_check
          %p356 = pneg %p112
        $region46: #{tpu_custom_call.1} parent=43 // pred_check_branch
          %358 = sbr.rel (%p356) target = $region48
        $region47: #{tpu_custom_call.1} parent=43 // pred_region
          %s359 = sand.u32 %s97, 1
          %s360 = scalar_lea.sflag [#allocation4], %s359
          %s361 = sand.u32 %s97, 1
          %s362 = smul.addr %s361, 8
          %s363 = scalar_lea.vmem [#allocation5], %s362
          %365 = dma.done %s360, 128
        $region48: #{tpu_custom_call.1} parent=43 // pred_fallthru
          _
      $region44: #{tpu_custom_call.1} parent=5 // pred_fallthru
        _
    $region6: #{tpu_custom_call.1} parent=1 // loop_footer
      %s19 = sadd.s32 1, %s15
    $region7: #{tpu_custom_call.1} parent=1 // loop_footer_branch
      %14 = sbr.rel target = $region3
    $region8: #{tpu_custom_call.1} parent=1 // loop_exit
      _
    %366 = vsyncpa [#allocation3], 1
    %s367 = scalar_lea.sflag [#allocation3], 1
    %368 = vsyncpa %s367, 1
    %369 = vsyncpa [#allocation4], 1
    %s370 = scalar_lea.sflag [#allocation4], 1
    %371 = vsyncpa %s370, 1

</llo_original>
